<compile_context>
chip_gen: v6e
topology: v6e:2x2x1
jax: 0.10.0
libtpu: 0.0.40
codegen_flags: <defaults>
</compile_context>

<pallas_src>
import jax
import jax.numpy as jnp
from jax.experimental import pallas as pl
from jax.experimental.pallas import tpu as pltpu

RRELU_SLOPE = (1.0 / 8.0 + 1.0 / 3.0) / 2.0  # eval-mode torch.rrelu slope = 11/48


def _leaky(v):
    return jnp.where(v >= 0, v, RRELU_SLOPE * v)


def _round_up(n, m):
    return ((n + m - 1) // m) * m


# --------------------------------- kernels --------------------------------- #

def _head_kernel(rows_ref,
                 w1i_ref, b1i_ref,
                 w1h_ref, b1h_ref,
                 w2a_ref, w2b_ref, b2_ref,
                 wout_ref,
                 o_ref):
    # rows_ref: (2, TM, H) bf16 -- [0] = x rows, [1] = last-hidden rows.
    # Weights bf16, biases f32; all matmuls accumulate in f32 on the MXU.
    x = rows_ref[0]
    hd = rows_ref[1]
    a = _leaky(jnp.dot(x, w1i_ref[...],
                       preferred_element_type=jnp.float32) + b1i_ref[...])
    h = _leaky(jnp.dot(hd, w1h_ref[...],
                       preferred_element_type=jnp.float32) + b1h_ref[...])
    c = _leaky(jnp.dot(a.astype(jnp.bfloat16), w2a_ref[...],
                       preferred_element_type=jnp.float32)
               + jnp.dot(h.astype(jnp.bfloat16), w2b_ref[...],
                         preferred_element_type=jnp.float32)
               + b2_ref[...])
    o_ref[...] = jnp.dot(c.astype(jnp.bfloat16), wout_ref[...],
                         preferred_element_type=jnp.float32).astype(o_ref.dtype)


def _head_kernel_xonly(x_ref, w1i_ref, b1i_ref, w2a_ref, b2e_ref, wout_ref,
                       o_ref):
    # hidden_states=None fast path: hidden rows are all zeros, so
    # leaky(0@W1h+b1h) is a constant row; its dense_2 contribution is folded
    # into b2e on the wrapper side.  Half the FLOPs / row DMA of the full path.
    a = _leaky(jnp.dot(x_ref[...], w1i_ref[...],
                       preferred_element_type=jnp.float32) + b1i_ref[...])
    c = _leaky(jnp.dot(a.astype(jnp.bfloat16), w2a_ref[...],
                       preferred_element_type=jnp.float32) + b2e_ref[...])
    o_ref[...] = jnp.dot(c.astype(jnp.bfloat16), wout_ref[...],
                         preferred_element_type=jnp.float32).astype(o_ref.dtype)


# -------------------------------- call setup ------------------------------- #

def _auto_row_tile():
    """128 matches v5e's 128-wide MXU; 256 matches v6e/v7x's 256-wide MXU."""
    try:
        kind = jax.devices()[0].device_kind.lower()
    except Exception:
        return 128
    if "v6" in kind or "v7" in kind:
        return 256
    return 128


def _vmem_limit_bytes(H, LP, row_tile):
    bf16, f32 = 2, 4
    weight_bytes = (8 * H * H + H * LP) * bf16      # w1i, w1h, w2a, w2b, wout
    bias_bytes = 6 * H * f32                        # b1i, b1h, b2 (<= 5H) + slack
    row_bytes = 2 * (2 * row_tile * H) * bf16       # stacked rows, double-buffered
    out_bytes = 2 * (row_tile * LP) * f32           # output tile, double-buffered
    inter_bytes = row_tile * (5 * H + LP) * f32     # a, h, c, out in f32
    inter_bytes += row_tile * 5 * H * bf16          # bf16 recasts fed to the MXU
    # Budget for the worst case (double-buffered weights fallback) + headroom.
    total = 2 * weight_bytes + bias_bytes + row_bytes + out_bytes + inter_bytes
    total = int(total * 1.5) + (4 << 20)
    try:
        cap = int(pltpu.get_tpu_info().vmem_capacity_bytes) - (8 << 20)
    except Exception:
        cap = 56 << 20                              # safe on v7x (64 MiB/TC)
    return max(16 << 20, min(total, cap))


def _build_call(kernel, grid, row_spec, weight_shapes, out_spec, out_shape,
                single_buffer_weights, vmem_limit, flops, bytes_accessed):
    if single_buffer_weights:
        def w_spec(shape):
            # Grid-invariant block: one buffer is enough; halves resident VMEM.
            return pl.BlockSpec(shape, lambda *_: (0,) * len(shape),
                                pipeline_mode=pl.Buffered(1))
    else:
        def w_spec(shape):
            return pl.BlockSpec(shape, lambda *_: (0,) * len(shape))

    return pl.pallas_call(
        kernel,
        out_shape=out_shape,
        grid_spec=pltpu.PrefetchScalarGridSpec(
            num_scalar_prefetch=0,
            grid=grid,
            in_specs=[row_spec] + [w_spec(s) for s in weight_shapes],
            out_specs=out_spec,
        ),
        compiler_params=pltpu.CompilerParams(
            dimension_semantics=("parallel",),
            vmem_limit_bytes=vmem_limit),
        cost_estimate=pl.CostEstimate(flops=int(flops), transcendentals=0,
                                      bytes_accessed=int(bytes_accessed)),
    )


# ---------------------------------- wrapper -------------------------------- #

def gpt2_classification_head(x, hidden_last=None, params=None, *, row_tile=None):
    """x: (B, S, H). hidden_last: (B, S, H) or None (module zeros fallback).

    Returns (B, S, num_labels) in x.dtype.
    """
    B, S, H = x.shape
    M = B * S
    L = params["wout"].shape[1]

    if row_tile is None:
        row_tile = _auto_row_tile()
    # bf16 sublane packing rule (multiple of 16); don't over-pad tiny batches.
    row_tile = max(16, _round_up(min(row_tile, _round_up(M, 16)), 16))
    Mp = _round_up(M, row_tile)                     # pad rows instead of asserting
    LP = _round_up(max(L, 1), 128)                  # lane-dense output width

    # --- wrapper-side layout / dtype prep (bf16 weights, f32 accumulation) ---
    w1i = params["w1i"].astype(jnp.bfloat16)        # (H, 2H)
    w1h = params["w1h"].astype(jnp.bfloat16)        # (H, 2H)
    w2a = params["w2"][: 2 * H, :].astype(jnp.bfloat16)   # dense_2 split: no concat
    w2b = params["w2"][2 * H:, :].astype(jnp.bfloat16)
    wout = jnp.pad(params["wout"], ((0, 0), (0, LP - L))).astype(jnp.bfloat16)
    b1i = params["b1i"].reshape(1, -1).astype(jnp.float32)   # (1, 2H)
    b1h = params["b1h"].reshape(1, -1).astype(jnp.float32)   # (1, 2H)
    b2 = params["b2"].reshape(1, -1).astype(jnp.float32)     # (1, H)

    x2 = x.reshape(M, H).astype(jnp.bfloat16)

    grid = (Mp // row_tile,)
    out_shape = jax.ShapeDtypeStruct((Mp, LP), x.dtype)
    out_spec = pl.BlockSpec((row_tile, LP), lambda i: (i, 0))
    vmem_limit = _vmem_limit_bytes(H, LP, row_tile)

    if hidden_last is None:
        # hidden == zeros: fold the constant hidden branch into dense_2's bias.
        b2_eff = _leaky(b1h) @ params["w2"][2 * H:, :].astype(jnp.float32) + b2
        rows = jnp.pad(x2, ((0, Mp - M), (0, 0))) if Mp != M else x2
        row_spec = pl.BlockSpec((row_tile, H), lambda i: (i, 0))
        weight_shapes = (w1i.shape, b1i.shape, w2a.shape, b2_eff.shape, wout.shape)
        args = (rows, w1i, b1i, w2a, b2_eff, wout)
        kernel = _head_kernel_xonly
        flops = Mp * (8 * H * H + 2 * H * LP)
        bytes_accessed = ((4 * H * H + H * LP) * 2 + 3 * H * 4
                          + Mp * H * 2 + Mp * LP * 4)
    else:
        h2 = hidden_last.reshape(M, H).astype(jnp.bfloat16)
        rows = jnp.stack([x2, h2], axis=0)          # (2, M, H): one DMA per step
        if Mp != M:
            rows = jnp.pad(rows, ((0, 0), (0, Mp - M), (0, 0)))
        row_spec = pl.BlockSpec((2, row_tile, H), lambda i: (0, i, 0))
        weight_shapes = (w1i.shape, b1i.shape, w1h.shape, b1h.shape,
                         w2a.shape, w2b.shape, b2.shape, wout.shape)
        args = (rows, w1i, b1i, w1h, b1h, w2a, w2b, b2, wout)
        kernel = _head_kernel
        flops = Mp * (16 * H * H + 2 * H * LP)
        bytes_accessed = ((8 * H * H + H * LP) * 2 + 5 * H * 4
                          + 2 * Mp * H * 2 + Mp * LP * 4)

    try:
        out = _build_call(kernel, grid, row_spec, weight_shapes, out_spec,
                          out_shape, True, vmem_limit, flops,
                          bytes_accessed)(*args)
    except Exception:
        # Fallback for jax versions where pipeline_mode / Buffered(1) is not
        # supported on BlockSpec: default (double-buffered) weight specs.
        out = _build_call(kernel, grid, row_spec, weight_shapes, out_spec,
                          out_shape, False, vmem_limit, flops,
                          bytes_accessed)(*args)

    return out[:M, :L].reshape(B, S, L)


# --------------------------------- reference ------------------------------- #

def _reference(x, hidden_last, params):
    a = _leaky(x @ params["w1i"] + params["b1i"][0])
    h = _leaky(hidden_last @ params["w1h"] + params["b1h"][0])
    cat = jnp.concatenate([a, h], axis=-1)
    c = _leaky(cat @ params["w2"] + params["b2"][0])
    return c @ params["wout"]


def init_params(key, hidden_size, num_labels, dtype=jnp.float32):
    ks = jax.random.split(key, 7)
    s = 0.1
    return {
        # weights stored as (in_features, out_features)
        "w1i": s * jax.random.normal(ks[0], (hidden_size, 2 * hidden_size), dtype),
        "b1i": s * jax.random.normal(ks[1], (1, 2 * hidden_size), dtype),
        "w1h": s * jax.random.normal(ks[2], (hidden_size, 2 * hidden_size), dtype),
        "b1h": s * jax.random.normal(ks[3], (1, 2 * hidden_size), dtype),
        "w2":  s * jax.random.normal(ks[4], (4 * hidden_size, hidden_size), dtype),
        "b2":  s * jax.random.normal(ks[5], (1, hidden_size), dtype),
        "wout": s * jax.random.normal(ks[6], (hidden_size, num_labels), dtype),
    }


if __name__ == "__main__":
    B, S, H, L = 2, 8, 32, 4  # batch, seq, n_embd, num_labels

    key = jax.random.PRNGKey(0)
    k_x, k_h, k_p = jax.random.split(key, 3)

    x = jax.random.normal(k_x, (B, S, H), jnp.float32)
    # simulate kwargs['hidden_states'][-1]
    hidden_last = jax.random.normal(k_h, (B, S, H), jnp.float32)
    params = init_params(k_p, H, L)

    out = gpt2_classification_head(x, hidden_last, params)
    out = jax.block_until_ready(out)

    ref = _reference(x, hidden_last, params)
    assert out.shape == (B, S, L)
    # bf16 weights/activations with f32 accumulation -> loose-ish tolerance.
    assert jnp.allclose(out, ref, atol=2e-2, rtol=3e-2), \
        float(jnp.max(jnp.abs(out - ref)))

    # also exercise the "no hidden_states" fast path (hidden = zeros_like(x))
    out0 = jax.block_until_ready(gpt2_classification_head(x, None, params))
    ref0 = _reference(x, jnp.zeros_like(x), params)
    assert out0.shape == (B, S, L)
    assert jnp.allclose(out0, ref0, atol=2e-2, rtol=3e-2), \
        float(jnp.max(jnp.abs(out0 - ref0)))

    print("KERNEL_OK")
</pallas_src>

<mosaic_0001>
module attributes {stable_mosaic.version = 11 : i64} {
  func.func @_head_kernel(%arg0: i32, %arg1: memref<2x16x32xbf16, #tpu.memory_space<vmem>>, %arg2: memref<32x64xbf16, #tpu.memory_space<vmem>>, %arg3: memref<1x64xf32, #tpu.memory_space<vmem>>, %arg4: memref<32x64xbf16, #tpu.memory_space<vmem>>, %arg5: memref<1x64xf32, #tpu.memory_space<vmem>>, %arg6: memref<64x32xbf16, #tpu.memory_space<vmem>>, %arg7: memref<64x32xbf16, #tpu.memory_space<vmem>>, %arg8: memref<1x32xf32, #tpu.memory_space<vmem>>, %arg9: memref<32x128xbf16, #tpu.memory_space<vmem>>, %arg10: memref<16x128xf32, #tpu.memory_space<vmem>>) attributes {dimension_semantics = [#tpu.dimension_semantics<parallel>], iteration_bounds = array<i64: 1>, scalar_prefetch = 0 : i64, scratch_operands = 0 : i64, tpu.core_type = #tpu.core_type<tc>, window_params = [{transform_indices = @transform_0, window_bounds = array<i64: 2, 16, 32>}, {pipeline_mode = #tpu.pipeline_mode<synchronous>, transform_indices = @transform_1, window_bounds = array<i64: 32, 64>}, {pipeline_mode = #tpu.pipeline_mode<synchronous>, transform_indices = @transform_2, window_bounds = array<i64: 1, 64>}, {pipeline_mode = #tpu.pipeline_mode<synchronous>, transform_indices = @transform_3, window_bounds = array<i64: 32, 64>}, {pipeline_mode = #tpu.pipeline_mode<synchronous>, transform_indices = @transform_4, window_bounds = array<i64: 1, 64>}, {pipeline_mode = #tpu.pipeline_mode<synchronous>, transform_indices = @transform_5, window_bounds = array<i64: 64, 32>}, {pipeline_mode = #tpu.pipeline_mode<synchronous>, transform_indices = @transform_6, window_bounds = array<i64: 64, 32>}, {pipeline_mode = #tpu.pipeline_mode<synchronous>, transform_indices = @transform_7, window_bounds = array<i64: 1, 32>}, {pipeline_mode = #tpu.pipeline_mode<synchronous>, transform_indices = @transform_8, window_bounds = array<i64: 32, 128>}, {transform_indices = @transform_9, window_bounds = array<i64: 16, 128>}]} {
    %c0 = arith.constant 0 : index
    %c0_0 = arith.constant 0 : index
    %c0_1 = arith.constant 0 : index
    %0 = vector.load %arg1[%c0, %c0_0, %c0_1] : memref<2x16x32xbf16, #tpu.memory_space<vmem>>, vector<1x16x32xbf16>
    %1 = vector.shape_cast %0 : vector<1x16x32xbf16> to vector<16x32xbf16>
    %c1 = arith.constant 1 : index
    %c0_2 = arith.constant 0 : index
    %c0_3 = arith.constant 0 : index
    %2 = vector.load %arg1[%c1, %c0_2, %c0_3] : memref<2x16x32xbf16, #tpu.memory_space<vmem>>, vector<1x16x32xbf16>
    %3 = vector.shape_cast %2 : vector<1x16x32xbf16> to vector<16x32xbf16>
    %c0_4 = arith.constant 0 : index
    %c0_5 = arith.constant 0 : index
    %4 = vector.load %arg2[%c0_4, %c0_5] : memref<32x64xbf16, #tpu.memory_space<vmem>>, vector<32x64xbf16>
    %cst = arith.constant dense<0.000000e+00> : vector<16x64xf32>
    %5 = tpu.matmul %1, %4, %cst {dimension_numbers = #tpu.dot_dimension_numbers<[1], [0], [0], [1], [0, 0, 1, 1], [], []>} : vector<16x32xbf16>, vector<32x64xbf16>, vector<16x64xf32> -> vector<16x64xf32>
    %c0_6 = arith.constant 0 : index
    %c0_7 = arith.constant 0 : index
    %6 = vector.load %arg3[%c0_6, %c0_7] : memref<1x64xf32, #tpu.memory_space<vmem>>, vector<1x64xf32>
    %7 = vector.broadcast %6 : vector<1x64xf32> to vector<16x64xf32>
    %8 = arith.addf %5, %7 : vector<16x64xf32>
    %cst_8 = arith.constant 0.000000e+00 : f32
    %9 = vector.broadcast %cst_8 : f32 to vector<16x64xf32>
    %10 = arith.cmpf oge, %8, %9 : vector<16x64xf32>
    %cst_9 = arith.constant 0.229166672 : f32
    %11 = vector.broadcast %cst_9 : f32 to vector<16x64xf32>
    %12 = arith.mulf %11, %8 : vector<16x64xf32>
    %13 = arith.select %10, %8, %12 : vector<16x64xi1>, vector<16x64xf32>
    %c0_10 = arith.constant 0 : index
    %c0_11 = arith.constant 0 : index
    %14 = vector.load %arg4[%c0_10, %c0_11] : memref<32x64xbf16, #tpu.memory_space<vmem>>, vector<32x64xbf16>
    %cst_12 = arith.constant dense<0.000000e+00> : vector<16x64xf32>
    %15 = tpu.matmul %3, %14, %cst_12 {dimension_numbers = #tpu.dot_dimension_numbers<[1], [0], [0], [1], [0, 0, 1, 1], [], []>} : vector<16x32xbf16>, vector<32x64xbf16>, vector<16x64xf32> -> vector<16x64xf32>
    %c0_13 = arith.constant 0 : index
    %c0_14 = arith.constant 0 : index
    %16 = vector.load %arg5[%c0_13, %c0_14] : memref<1x64xf32, #tpu.memory_space<vmem>>, vector<1x64xf32>
    %17 = vector.broadcast %16 : vector<1x64xf32> to vector<16x64xf32>
    %18 = arith.addf %15, %17 : vector<16x64xf32>
    %cst_15 = arith.constant 0.000000e+00 : f32
    %19 = vector.broadcast %cst_15 : f32 to vector<16x64xf32>
    %20 = arith.cmpf oge, %18, %19 : vector<16x64xf32>
    %cst_16 = arith.constant 0.229166672 : f32
    %21 = vector.broadcast %cst_16 : f32 to vector<16x64xf32>
    %22 = arith.mulf %21, %18 : vector<16x64xf32>
    %23 = arith.select %20, %18, %22 : vector<16x64xi1>, vector<16x64xf32>
    %24 = arith.truncf %13 : vector<16x64xf32> to vector<16x64xbf16>
    %c0_17 = arith.constant 0 : index
    %c0_18 = arith.constant 0 : index
    %25 = vector.load %arg6[%c0_17, %c0_18] : memref<64x32xbf16, #tpu.memory_space<vmem>>, vector<64x32xbf16>
    %cst_19 = arith.constant dense<0.000000e+00> : vector<16x32xf32>
    %26 = tpu.matmul %24, %25, %cst_19 {dimension_numbers = #tpu.dot_dimension_numbers<[1], [0], [0], [1], [0, 0, 1, 1], [], []>} : vector<16x64xbf16>, vector<64x32xbf16>, vector<16x32xf32> -> vector<16x32xf32>
    %27 = arith.truncf %23 : vector<16x64xf32> to vector<16x64xbf16>
    %c0_20 = arith.constant 0 : index
    %c0_21 = arith.constant 0 : index
    %28 = vector.load %arg7[%c0_20, %c0_21] : memref<64x32xbf16, #tpu.memory_space<vmem>>, vector<64x32xbf16>
    %cst_22 = arith.constant dense<0.000000e+00> : vector<16x32xf32>
    %29 = tpu.matmul %27, %28, %cst_22 {dimension_numbers = #tpu.dot_dimension_numbers<[1], [0], [0], [1], [0, 0, 1, 1], [], []>} : vector<16x64xbf16>, vector<64x32xbf16>, vector<16x32xf32> -> vector<16x32xf32>
    %30 = arith.addf %26, %29 : vector<16x32xf32>
    %c0_23 = arith.constant 0 : index
    %c0_24 = arith.constant 0 : index
    %31 = vector.load %arg8[%c0_23, %c0_24] : memref<1x32xf32, #tpu.memory_space<vmem>>, vector<1x32xf32>
    %32 = vector.broadcast %31 : vector<1x32xf32> to vector<16x32xf32>
    %33 = arith.addf %30, %32 : vector<16x32xf32>
    %cst_25 = arith.constant 0.000000e+00 : f32
    %34 = vector.broadcast %cst_25 : f32 to vector<16x32xf32>
    %35 = arith.cmpf oge, %33, %34 : vector<16x32xf32>
    %cst_26 = arith.constant 0.229166672 : f32
    %36 = vector.broadcast %cst_26 : f32 to vector<16x32xf32>
    %37 = arith.mulf %36, %33 : vector<16x32xf32>
    %38 = arith.select %35, %33, %37 : vector<16x32xi1>, vector<16x32xf32>
    %39 = arith.truncf %38 : vector<16x32xf32> to vector<16x32xbf16>
    %c0_27 = arith.constant 0 : index
    %c0_28 = arith.constant 0 : index
    %40 = vector.load %arg9[%c0_27, %c0_28] : memref<32x128xbf16, #tpu.memory_space<vmem>>, vector<32x128xbf16>
    %cst_29 = arith.constant dense<0.000000e+00> : vector<16x128xf32>
    %41 = tpu.matmul %39, %40, %cst_29 {dimension_numbers = #tpu.dot_dimension_numbers<[1], [0], [0], [1], [0, 0, 1, 1], [], []>} : vector<16x32xbf16>, vector<32x128xbf16>, vector<16x128xf32> -> vector<16x128xf32>
    %c0_30 = arith.constant 0 : index
    %c0_31 = arith.constant 0 : index
    %42 = vector.load %arg10[%c0_30, %c0_31] : memref<16x128xf32, #tpu.memory_space<vmem>>, vector<16x128xf32>
    tpu.vector_store %arg10[%c0_30, %c0_31], %41 {strides = array<i32>} : memref<16x128xf32, #tpu.memory_space<vmem>>, vector<16x128xf32>,
    return
  }
  func.func @transform_0(%arg0: i32) -> (i32, i32, i32) {
    %c0_i32 = arith.constant 0 : i32
    %c0_i32_0 = arith.constant 0 : i32
    %c0_i32_1 = arith.constant 0 : i32
    return %c0_i32, %arg0, %c0_i32_0 : i32, i32, i32
  }
  func.func @transform_1(%arg0: i32) -> (i32, i32) {
    %c0_i32 = arith.constant 0 : i32
    %c0_i32_0 = arith.constant 0 : i32
    %c0_i32_1 = arith.constant 0 : i32
    return %c0_i32, %c0_i32_0 : i32, i32
  }
  func.func @transform_2(%arg0: i32) -> (i32, i32) {
    %c0_i32 = arith.constant 0 : i32
    %c0_i32_0 = arith.constant 0 : i32
    %c0_i32_1 = arith.constant 0 : i32
    return %c0_i32, %c0_i32_0 : i32, i32
  }
  func.func @transform_3(%arg0: i32) -> (i32, i32) {
    %c0_i32 = arith.constant 0 : i32
    %c0_i32_0 = arith.constant 0 : i32
    %c0_i32_1 = arith.constant 0 : i32
    return %c0_i32, %c0_i32_0 : i32, i32
  }
  func.func @transform_4(%arg0: i32) -> (i32, i32) {
    %c0_i32 = arith.constant 0 : i32
    %c0_i32_0 = arith.constant 0 : i32
    %c0_i32_1 = arith.constant 0 : i32
    return %c0_i32, %c0_i32_0 : i32, i32
  }
  func.func @transform_5(%arg0: i32) -> (i32, i32) {
    %c0_i32 = arith.constant 0 : i32
    %c0_i32_0 = arith.constant 0 : i32
    %c0_i32_1 = arith.constant 0 : i32
    return %c0_i32, %c0_i32_0 : i32, i32
  }
  func.func @transform_6(%arg0: i32) -> (i32, i32) {
    %c0_i32 = arith.constant 0 : i32
    %c0_i32_0 = arith.constant 0 : i32
    %c0_i32_1 = arith.constant 0 : i32
    return %c0_i32, %c0_i32_0 : i32, i32
  }
  func.func @transform_7(%arg0: i32) -> (i32, i32) {
    %c0_i32 = arith.constant 0 : i32
    %c0_i32_0 = arith.constant 0 : i32
    %c0_i32_1 = arith.constant 0 : i32
    return %c0_i32, %c0_i32_0 : i32, i32
  }
  func.func @transform_8(%arg0: i32) -> (i32, i32) {
    %c0_i32 = arith.constant 0 : i32
    %c0_i32_0 = arith.constant 0 : i32
    %c0_i32_1 = arith.constant 0 : i32
    return %c0_i32, %c0_i32_0 : i32, i32
  }
  func.func @transform_9(%arg0: i32) -> (i32, i32) {
    %c0_i32 = arith.constant 0 : i32
    %c0_i32_0 = arith.constant 0 : i32
    return %arg0, %c0_i32 : i32, i32
  }
}

module attributes {stable_mosaic.version = 11 : i64} {
  func.func @_head_kernel(%arg0: i32, %arg1: memref<2x16x32xbf16, #tpu.memory_space<vmem>>, %arg2: memref<32x64xbf16, #tpu.memory_space<vmem>>, %arg3: memref<1x64xf32, #tpu.memory_space<vmem>>, %arg4: memref<32x64xbf16, #tpu.memory_space<vmem>>, %arg5: memref<1x64xf32, #tpu.memory_space<vmem>>, %arg6: memref<64x32xbf16, #tpu.memory_space<vmem>>, %arg7: memref<64x32xbf16, #tpu.memory_space<vmem>>, %arg8: memref<1x32xf32, #tpu.memory_space<vmem>>, %arg9: memref<32x128xbf16, #tpu.memory_space<vmem>>, %arg10: memref<16x128xf32, #tpu.memory_space<vmem>>) attributes {dimension_semantics = [#tpu.dimension_semantics<parallel>], iteration_bounds = array<i64: 1>, scalar_prefetch = 0 : i64, scratch_operands = 0 : i64, tpu.core_type = #tpu.core_type<tc>, window_params = [{transform_indices = @transform_0, window_bounds = array<i64: 2, 16, 32>}, {pipeline_mode = #tpu.pipeline_mode<synchronous>, transform_indices = @transform_1, window_bounds = array<i64: 32, 64>}, {pipeline_mode = #tpu.pipeline_mode<synchronous>, transform_indices = @transform_2, window_bounds = array<i64: 1, 64>}, {pipeline_mode = #tpu.pipeline_mode<synchronous>, transform_indices = @transform_3, window_bounds = array<i64: 32, 64>}, {pipeline_mode = #tpu.pipeline_mode<synchronous>, transform_indices = @transform_4, window_bounds = array<i64: 1, 64>}, {pipeline_mode = #tpu.pipeline_mode<synchronous>, transform_indices = @transform_5, window_bounds = array<i64: 64, 32>}, {pipeline_mode = #tpu.pipeline_mode<synchronous>, transform_indices = @transform_6, window_bounds = array<i64: 64, 32>}, {pipeline_mode = #tpu.pipeline_mode<synchronous>, transform_indices = @transform_7, window_bounds = array<i64: 1, 32>}, {pipeline_mode = #tpu.pipeline_mode<synchronous>, transform_indices = @transform_8, window_bounds = array<i64: 32, 128>}, {transform_indices = @transform_9, window_bounds = array<i64: 16, 128>}]} {
    %c0 = arith.constant 0 : index
    %c0_0 = arith.constant 0 : index
    %c0_1 = arith.constant 0 : index
    %0 = vector.load %arg1[%c0, %c0_0, %c0_1] : memref<2x16x32xbf16, #tpu.memory_space<vmem>>, vector<1x16x32xbf16>
    %1 = vector.shape_cast %0 : vector<1x16x32xbf16> to vector<16x32xbf16>
    %c1 = arith.constant 1 : index
    %c0_2 = arith.constant 0 : index
    %c0_3 = arith.constant 0 : index
    %2 = vector.load %arg1[%c1, %c0_2, %c0_3] : memref<2x16x32xbf16, #tpu.memory_space<vmem>>, vector<1x16x32xbf16>
    %3 = vector.shape_cast %2 : vector<1x16x32xbf16> to vector<16x32xbf16>
    %c0_4 = arith.constant 0 : index
    %c0_5 = arith.constant 0 : index
    %4 = vector.load %arg2[%c0_4, %c0_5] : memref<32x64xbf16, #tpu.memory_space<vmem>>, vector<32x64xbf16>
    %cst = arith.constant dense<0.000000e+00> : vector<16x64xf32>
    %5 = tpu.matmul %1, %4, %cst {dimension_numbers = #tpu.dot_dimension_numbers<[1], [0], [0], [1], [0, 0, 1, 1], [], []>} : vector<16x32xbf16>, vector<32x64xbf16>, vector<16x64xf32> -> vector<16x64xf32>
    %c0_6 = arith.constant 0 : index
    %c0_7 = arith.constant 0 : index
    %6 = vector.load %arg3[%c0_6, %c0_7] : memref<1x64xf32, #tpu.memory_space<vmem>>, vector<1x64xf32>
    %7 = vector.broadcast %6 : vector<1x64xf32> to vector<16x64xf32>
    %8 = arith.addf %5, %7 : vector<16x64xf32>
    %cst_8 = arith.constant 0.000000e+00 : f32
    %9 = vector.broadcast %cst_8 : f32 to vector<16x64xf32>
    %10 = arith.cmpf oge, %8, %9 : vector<16x64xf32>
    %cst_9 = arith.constant 0.229166672 : f32
    %11 = vector.broadcast %cst_9 : f32 to vector<16x64xf32>
    %12 = arith.mulf %11, %8 : vector<16x64xf32>
    %13 = arith.select %10, %8, %12 : vector<16x64xi1>, vector<16x64xf32>
    %c0_10 = arith.constant 0 : index
    %c0_11 = arith.constant 0 : index
    %14 = vector.load %arg4[%c0_10, %c0_11] : memref<32x64xbf16, #tpu.memory_space<vmem>>, vector<32x64xbf16>
    %cst_12 = arith.constant dense<0.000000e+00> : vector<16x64xf32>
    %15 = tpu.matmul %3, %14, %cst_12 {dimension_numbers = #tpu.dot_dimension_numbers<[1], [0], [0], [1], [0, 0, 1, 1], [], []>} : vector<16x32xbf16>, vector<32x64xbf16>, vector<16x64xf32> -> vector<16x64xf32>
    %c0_13 = arith.constant 0 : index
    %c0_14 = arith.constant 0 : index
    %16 = vector.load %arg5[%c0_13, %c0_14] : memref<1x64xf32, #tpu.memory_space<vmem>>, vector<1x64xf32>
    %17 = vector.broadcast %16 : vector<1x64xf32> to vector<16x64xf32>
    %18 = arith.addf %15, %17 : vector<16x64xf32>
    %cst_15 = arith.constant 0.000000e+00 : f32
    %19 = vector.broadcast %cst_15 : f32 to vector<16x64xf32>
    %20 = arith.cmpf oge, %18, %19 : vector<16x64xf32>
    %cst_16 = arith.constant 0.229166672 : f32
    %21 = vector.broadcast %cst_16 : f32 to vector<16x64xf32>
    %22 = arith.mulf %21, %18 : vector<16x64xf32>
    %23 = arith.select %20, %18, %22 : vector<16x64xi1>, vector<16x64xf32>
    %24 = arith.truncf %13 : vector<16x64xf32> to vector<16x64xbf16>
    %c0_17 = arith.constant 0 : index
    %c0_18 = arith.constant 0 : index
    %25 = vector.load %arg6[%c0_17, %c0_18] : memref<64x32xbf16, #tpu.memory_space<vmem>>, vector<64x32xbf16>
    %cst_19 = arith.constant dense<0.000000e+00> : vector<16x32xf32>
    %26 = tpu.matmul %24, %25, %cst_19 {dimension_numbers = #tpu.dot_dimension_numbers<[1], [0], [0], [1], [0, 0, 1, 1], [], []>} : vector<16x64xbf16>, vector<64x32xbf16>, vector<16x32xf32> -> vector<16x32xf32>
    %27 = arith.truncf %23 : vector<16x64xf32> to vector<16x64xbf16>
    %c0_20 = arith.constant 0 : index
    %c0_21 = arith.constant 0 : index
    %28 = vector.load %arg7[%c0_20, %c0_21] : memref<64x32xbf16, #tpu.memory_space<vmem>>, vector<64x32xbf16>
    %cst_22 = arith.constant dense<0.000000e+00> : vector<16x32xf32>
    %29 = tpu.matmul %27, %28, %cst_22 {dimension_numbers = #tpu.dot_dimension_numbers<[1], [0], [0], [1], [0, 0, 1, 1], [], []>} : vector<16x64xbf16>, vector<64x32xbf16>, vector<16x32xf32> -> vector<16x32xf32>
    %30 = arith.addf %26, %29 : vector<16x32xf32>
    %c0_23 = arith.constant 0 : index
    %c0_24 = arith.constant 0 : index
    %31 = vector.load %arg8[%c0_23, %c0_24] : memref<1x32xf32, #tpu.memory_space<vmem>>, vector<1x32xf32>
    %32 = vector.broadcast %31 : vector<1x32xf32> to vector<16x32xf32>
    %33 = arith.addf %30, %32 : vector<16x32xf32>
    %cst_25 = arith.constant 0.000000e+00 : f32
    %34 = vector.broadcast %cst_25 : f32 to vector<16x32xf32>
    %35 = arith.cmpf oge, %33, %34 : vector<16x32xf32>
    %cst_26 = arith.constant 0.229166672 : f32
    %36 = vector.broadcast %cst_26 : f32 to vector<16x32xf32>
    %37 = arith.mulf %36, %33 : vector<16x32xf32>
    %38 = arith.select %35, %33, %37 : vector<16x32xi1>, vector<16x32xf32>
    %39 = arith.truncf %38 : vector<16x32xf32> to vector<16x32xbf16>
    %c0_27 = arith.constant 0 : index
    %c0_28 = arith.constant 0 : index
    %40 = vector.load %arg9[%c0_27, %c0_28] : memref<32x128xbf16, #tpu.memory_space<vmem>>, vector<32x128xbf16>
    %cst_29 = arith.constant dense<0.000000e+00> : vector<16x128xf32>
    %41 = tpu.matmul %39, %40, %cst_29 {dimension_numbers = #tpu.dot_dimension_numbers<[1], [0], [0], [1], [0, 0, 1, 1], [], []>} : vector<16x32xbf16>, vector<32x128xbf16>, vector<16x128xf32> -> vector<16x128xf32>
    %c0_30 = arith.constant 0 : index
    %c0_31 = arith.constant 0 : index
    %42 = vector.load %arg10[%c0_30, %c0_31] : memref<16x128xf32, #tpu.memory_space<vmem>>, vector<16x128xf32>
    tpu.vector_store %arg10[%c0_30, %c0_31], %41 {strides = array<i32>} : memref<16x128xf32, #tpu.memory_space<vmem>>, vector<16x128xf32>,
    return
  }
  func.func @transform_0(%arg0: i32) -> (i32, i32, i32) {
    %c0_i32 = arith.constant 0 : i32
    %c0_i32_0 = arith.constant 0 : i32
    %c0_i32_1 = arith.constant 0 : i32
    return %c0_i32, %arg0, %c0_i32_0 : i32, i32, i32
  }
  func.func @transform_1(%arg0: i32) -> (i32, i32) {
    %c0_i32 = arith.constant 0 : i32
    %c0_i32_0 = arith.constant 0 : i32
    %c0_i32_1 = arith.constant 0 : i32
    return %c0_i32, %c0_i32_0 : i32, i32
  }
  func.func @transform_2(%arg0: i32) -> (i32, i32) {
    %c0_i32 = arith.constant 0 : i32
    %c0_i32_0 = arith.constant 0 : i32
    %c0_i32_1 = arith.constant 0 : i32
    return %c0_i32, %c0_i32_0 : i32, i32
  }
  func.func @transform_3(%arg0: i32) -> (i32, i32) {
    %c0_i32 = arith.constant 0 : i32
    %c0_i32_0 = arith.constant 0 : i32
    %c0_i32_1 = arith.constant 0 : i32
    return %c0_i32, %c0_i32_0 : i32, i32
  }
  func.func @transform_4(%arg0: i32) -> (i32, i32) {
    %c0_i32 = arith.constant 0 : i32
    %c0_i32_0 = arith.constant 0 : i32
    %c0_i32_1 = arith.constant 0 : i32
    return %c0_i32, %c0_i32_0 : i32, i32
  }
  func.func @transform_5(%arg0: i32) -> (i32, i32) {
    %c0_i32 = arith.constant 0 : i32
    %c0_i32_0 = arith.constant 0 : i32
    %c0_i32_1 = arith.constant 0 : i32
    return %c0_i32, %c0_i32_0 : i32, i32
  }
  func.func @transform_6(%arg0: i32) -> (i32, i32) {
    %c0_i32 = arith.constant 0 : i32
    %c0_i32_0 = arith.constant 0 : i32
    %c0_i32_1 = arith.constant 0 : i32
    return %c0_i32, %c0_i32_0 : i32, i32
  }
  func.func @transform_7(%arg0: i32) -> (i32, i32) {
    %c0_i32 = arith.constant 0 : i32
    %c0_i32_0 = arith.constant 0 : i32
    %c0_i32_1 = arith.constant 0 : i32
    return %c0_i32, %c0_i32_0 : i32, i32
  }
  func.func @transform_8(%arg0: i32) -> (i32, i32) {
    %c0_i32 = arith.constant 0 : i32
    %c0_i32_0 = arith.constant 0 : i32
    %c0_i32_1 = arith.constant 0 : i32
    return %c0_i32, %c0_i32_0 : i32, i32
  }
  func.func @transform_9(%arg0: i32) -> (i32, i32) {
    %c0_i32 = arith.constant 0 : i32
    %c0_i32_0 = arith.constant 0 : i32
    return %arg0, %c0_i32 : i32, i32
  }
}

</mosaic_0001>

<llo_original>
// kernel: tpu_custom_call.1
$region0: #{tpu_custom_call.1}
  #allocation0 [shape = 'u32[]', space=smem, size = 0x4, offset = 0x4, fixed_abs, tag = 'smem constant byte address 0x4 - core index']
  #allocation1 [shape = 'u32[144,128]{1,0:T(1,128)}', space=vmem, size = 0x12000, scoped, tag = 'internal scratch']
  %s0 = inlined_call_operand.vmem [shape: bf16[2,16,32], index: 0, kind: input, shape index: {}]
  %s1 = inlined_call_operand.vmem [shape: bf16[32,64], index: 1, kind: input, shape index: {}]
  %s2 = inlined_call_operand.vmem [shape: f32[1,64], index: 2, kind: input, shape index: {}]
  %s3 = inlined_call_operand.vmem [shape: bf16[32,64], index: 3, kind: input, shape index: {}]
  %s4 = inlined_call_operand.vmem [shape: f32[1,64], index: 4, kind: input, shape index: {}]
  %s5 = inlined_call_operand.vmem [shape: bf16[64,32], index: 5, kind: input, shape index: {}]
  %s6 = inlined_call_operand.vmem [shape: bf16[64,32], index: 6, kind: input, shape index: {}]
  %s7 = inlined_call_operand.vmem [shape: f32[1,32], index: 7, kind: input, shape index: {}]
  %s8 = inlined_call_operand.vmem [shape: bf16[32,128], index: 8, kind: input, shape index: {}]
  %s9 = inlined_call_operand.hbm [shape: f32[16,128], index: 9, kind: output, shape index: {}]
  %s10 = sld [smem:[#allocation0]]
  $region46: #{tpu_custom_call.1} parent=0
    _
  %s12 = ssub.s32 1, %s10
  %s13 = scalar_select 0, %s12, %s10
  $region1: #{tpu_custom_call.1} parent=0
    #allocation2 [shape = 'u8[8192]{0}', space=vmem, size = 0x2000, scoped, tag = 'output window, operand 0, single buffered']
    #allocation3 [shape = 's32[1]{0}', space=sflag, size = 0x4, scoped, tag = 'scoped memory for tpu_custom_call.1']
    %14 = vsyncpa [#allocation3], 0
    // Predicated region
    $region2: #{tpu_custom_call.1} parent=1 // pred_check
      _
    $region3: #{tpu_custom_call.1} parent=1 // pred_check_branch
      %16 = sbr.rel (0) target = $region5
    $region4: #{tpu_custom_call.1} parent=1 // pred_region
      _
    $region5: #{tpu_custom_call.1} parent=1 // pred_fallthru
      _
    // Predicated region
    $region6: #{tpu_custom_call.1} parent=1 // pred_check
      _
    $region7: #{tpu_custom_call.1} parent=1 // pred_check_branch
      %18 = sbr.rel (0) target = $region9
    $region8: #{tpu_custom_call.1} parent=1 // pred_region
      _
    $region9: #{tpu_custom_call.1} parent=1 // pred_fallthru
      _
    // Predicated region
    $region10: #{tpu_custom_call.1} parent=1 // pred_check
      _
    $region11: #{tpu_custom_call.1} parent=1 // pred_check_branch
      %20 = sbr.rel (0) target = $region13
    $region12: #{tpu_custom_call.1} parent=1 // pred_region
      _
    $region13: #{tpu_custom_call.1} parent=1 // pred_fallthru
      _
    // Predicated region
    $region14: #{tpu_custom_call.1} parent=1 // pred_check
      _
    $region15: #{tpu_custom_call.1} parent=1 // pred_check_branch
      %22 = sbr.rel (0) target = $region17
    $region16: #{tpu_custom_call.1} parent=1 // pred_region
      _
    $region17: #{tpu_custom_call.1} parent=1 // pred_fallthru
      _
    // Predicated region
    $region18: #{tpu_custom_call.1} parent=1 // pred_check
      _
    $region19: #{tpu_custom_call.1} parent=1 // pred_check_branch
      %24 = sbr.rel (0) target = $region21
    $region20: #{tpu_custom_call.1} parent=1 // pred_region
      _
    $region21: #{tpu_custom_call.1} parent=1 // pred_fallthru
      _
    // Predicated region
    $region22: #{tpu_custom_call.1} parent=1 // pred_check
      _
    $region23: #{tpu_custom_call.1} parent=1 // pred_check_branch
      %26 = sbr.rel (0) target = $region25
    $region24: #{tpu_custom_call.1} parent=1 // pred_region
      _
    $region25: #{tpu_custom_call.1} parent=1 // pred_fallthru
      _
    // Predicated region
    $region26: #{tpu_custom_call.1} parent=1 // pred_check
      _
    $region27: #{tpu_custom_call.1} parent=1 // pred_check_branch
      %28 = sbr.rel (0) target = $region29
    $region28: #{tpu_custom_call.1} parent=1 // pred_region
      _
    $region29: #{tpu_custom_call.1} parent=1 // pred_fallthru
      _
    // Predicated region
    $region30: #{tpu_custom_call.1} parent=1 // pred_check
      _
    $region31: #{tpu_custom_call.1} parent=1 // pred_check_branch
      %30 = sbr.rel (0) target = $region33
    $region32: #{tpu_custom_call.1} parent=1 // pred_region
      _
    $region33: #{tpu_custom_call.1} parent=1 // pred_fallthru
      _
    // Predicated region
    $region34: #{tpu_custom_call.1} parent=1 // pred_check
      _
    $region35: #{tpu_custom_call.1} parent=1 // pred_check_branch
      %32 = sbr.rel (0) target = $region37
    $region36: #{tpu_custom_call.1} parent=1 // pred_region
      _
    $region37: #{tpu_custom_call.1} parent=1 // pred_fallthru
      _
    %v34 = vld [vmem:[%s0] sm:$0xf]
    %v35 = vld [vmem:[%s0 + $0x4] sm:$0xf]
    %s36 = scalar_lea.vmem %s0, 8
    %v37 = vld [vmem:[%s36] sm:$0xf]
    %v38 = vld [vmem:[%s36 + $0x4] sm:$0xf]
    %v39 = vld [vmem:[%s1] sm:$0xf]
    %v40 = vld [vmem:[%s1 + $0x4] sm:$0xf]
    %v41 = vld [vmem:[%s1 + $0x8] sm:$0xf]
    %v42 = vld [vmem:[%s1 + $0xc] sm:$0xf]
    %v43 = vld [vmem:[%s2] sm:$0x1]
    %v45 = vlaneseq
    %v46 = vshrl.u32 %v45, 7
    %v47 = vsub.s32 0, %v46
    %v48 = vrot.slane %v43, %v47
    %v52 = vunpack.c.l.b16 %v34
    %v53 = vunpack.c.l.b16 %v35
    %v54 = vpack.c.b16 %v53, %v52
    %v59 = vunpack.c.l.b16 %v39
    %v60 = vunpack.c.l.b16 %v40
    %v61 = vunpack.c.l.b16 %v41
    %v62 = vunpack.c.l.b16 %v42
    %v63 = vpack.c.b16 %v60, %v59
    %v64 = vpack.c.b16 %v62, %v61
    %vm67 = vcmask 261120
    %v69 = vsel %vm67, %v54, 0
    %71 = vmatprep.subr.bf16.mxu0 0
    %72 = vmatpush1.bf16.msra.mxu0 0
    %73 = vmatprep.subr.bf16.mxu0 0
    %74 = vmatpush1.bf16.msra.mxu0 0
    %75 = vmatprep.subr.bf16.mxu0 0
    %76 = vmatpush1.bf16.msra.mxu0 0
    %77 = vmatprep.subr.bf16.mxu0 0
    %78 = vmatpush1.bf16.msra.mxu0 0
    %79 = vmatprep.subr.bf16.mxu0 0
    %80 = vmatpush1.bf16.msra.mxu0 0
    %81 = vmatprep.subr.bf16.mxu0 0
    %82 = vmatpush1.bf16.msra.mxu0 0
    %83 = vmatprep.subr.bf16.mxu0 0
    %84 = vmatpush1.bf16.msra.mxu0 %v64
    %85 = vmatprep.subr.bf16.mxu0 0
    %86 = vmatpush1.bf16.msra.mxu0 %v63
    %87 = vmatprep.subr.bf16.mxu0 0
    %88 = vmatpush2.bf16.msra.mxu0 0
    %89 = vmatprep.subr.bf16.mxu0 0
    %90 = vmatpush2.bf16.msra.mxu0 0
    %91 = vmatprep.subr.bf16.mxu0 0
    %92 = vmatpush2.bf16.msra.mxu0 0
    %93 = vmatprep.subr.bf16.mxu0 0
    %94 = vmatpush2.bf16.msra.mxu0 0
    %95 = vmatprep.subr.bf16.mxu0 0
    %96 = vmatpush2.bf16.msra.mxu0 0
    %97 = vmatprep.subr.bf16.mxu0 0
    %98 = vmatpush2.bf16.msra.mxu0 0
    %99 = vmatprep.subr.bf16.mxu0 0
    %100 = vmatpush2.bf16.msra.mxu0 0
    %101 = vmatprep.subr.bf16.mxu0 0
    %102 = vmatpush2.bf16.msra.mxu0 0
    %103 = vmatprep.mubr.bf16.mxu0 0
    %104 = vmatmul.mubr.bf16.gmra.mxu0 %v69
    %v105 = vpop.f32.mrf.mxu0
    %v106 = vadd.f32 %v48, %v105
    %v107 = vpop.f32.mrf.mxu0
    %v108 = vpop.f32.mrf.mxu0
    %v109 = vadd.f32 %v48, %v108
    %v110 = vpop.f32.mrf.mxu0
    %111 = vdwg.mxu0
    %vm112 = vcmp.ge.f32.partialorder %v106, 0.0
    %vm113 = vcmp.ge.f32.partialorder %v109, 0.0
    %v114 = vmul.f32 %v106, 0.22916667
    %v115 = vmul.f32 %v109, 0.22916667
    %v116 = vsel %vm112, %v106, %v114
    %v117 = vsel %vm113, %v109, %v115
    %v118 = vld [vmem:[%s3] sm:$0xf]
    %v119 = vld [vmem:[%s3 + $0x4] sm:$0xf]
    %v120 = vld [vmem:[%s3 + $0x8] sm:$0xf]
    %v121 = vld [vmem:[%s3 + $0xc] sm:$0xf]
    %v122 = vld [vmem:[%s4] sm:$0x1]
    %v124 = vlaneseq
    %v125 = vshrl.u32 %v124, 7
    %v126 = vsub.s32 0, %v125
    %v127 = vrot.slane %v122, %v126
    %v131 = vunpack.c.l.b16 %v37
    %v132 = vunpack.c.l.b16 %v38
    %v133 = vpack.c.b16 %v132, %v131
    %v138 = vunpack.c.l.b16 %v118
    %v139 = vunpack.c.l.b16 %v119
    %v140 = vunpack.c.l.b16 %v120
    %v141 = vunpack.c.l.b16 %v121
    %v142 = vpack.c.b16 %v139, %v138
    %v143 = vpack.c.b16 %v141, %v140
    %v147 = vsel %vm67, %v133, 0
    %149 = vmatprep.subr.bf16.mxu0 0
    %150 = vmatpush1.bf16.msra.mxu0 0
    %151 = vmatprep.subr.bf16.mxu0 0
    %152 = vmatpush1.bf16.msra.mxu0 0
    %153 = vmatprep.subr.bf16.mxu0 0
    %154 = vmatpush1.bf16.msra.mxu0 0
    %155 = vmatprep.subr.bf16.mxu0 0
    %156 = vmatpush1.bf16.msra.mxu0 0
    %157 = vmatprep.subr.bf16.mxu0 0
    %158 = vmatpush1.bf16.msra.mxu0 0
    %159 = vmatprep.subr.bf16.mxu0 0
    %160 = vmatpush1.bf16.msra.mxu0 0
    %161 = vmatprep.subr.bf16.mxu0 0
    %162 = vmatpush1.bf16.msra.mxu0 %v143
    %163 = vmatprep.subr.bf16.mxu0 0
    %164 = vmatpush1.bf16.msra.mxu0 %v142
    %165 = vmatprep.subr.bf16.mxu0 0
    %166 = vmatpush2.bf16.msra.mxu0 0
    %167 = vmatprep.subr.bf16.mxu0 0
    %168 = vmatpush2.bf16.msra.mxu0 0
    %169 = vmatprep.subr.bf16.mxu0 0
    %170 = vmatpush2.bf16.msra.mxu0 0
    %171 = vmatprep.subr.bf16.mxu0 0
    %172 = vmatpush2.bf16.msra.mxu0 0
    %173 = vmatprep.subr.bf16.mxu0 0
    %174 = vmatpush2.bf16.msra.mxu0 0
    %175 = vmatprep.subr.bf16.mxu0 0
    %176 = vmatpush2.bf16.msra.mxu0 0
    %177 = vmatprep.subr.bf16.mxu0 0
    %178 = vmatpush2.bf16.msra.mxu0 0
    %179 = vmatprep.subr.bf16.mxu0 0
    %180 = vmatpush2.bf16.msra.mxu0 0
    %181 = vmatprep.mubr.bf16.mxu0 0
    %182 = vmatmul.mubr.bf16.gmra.mxu0 %v147
    %v183 = vpop.f32.mrf.mxu0
    %v184 = vadd.f32 %v127, %v183
    %v185 = vpop.f32.mrf.mxu0
    %v186 = vpop.f32.mrf.mxu0
    %v187 = vadd.f32 %v127, %v186
    %v188 = vpop.f32.mrf.mxu0
    %189 = vdwg.mxu0
    %vm190 = vcmp.ge.f32.partialorder %v184, 0.0
    %vm191 = vcmp.ge.f32.partialorder %v187, 0.0
    %v192 = vmul.f32 %v184, 0.22916667
    %v193 = vmul.f32 %v187, 0.22916667
    %v194 = vsel %vm190, %v184, %v192
    %v195 = vsel %vm191, %v187, %v193
    %v196 = vpack.c.bf16 %v117, %v116
    %v197 = vld [vmem:[%s5] sm:$0xf]
    %v198 = vld [vmem:[%s5 + $0x4] sm:$0xf]
    %v199 = vld [vmem:[%s5 + $0x8] sm:$0xf]
    %v200 = vld [vmem:[%s5 + $0xc] sm:$0xf]
    %v201 = vld [vmem:[%s5 + $0x10] sm:$0xf]
    %v202 = vld [vmem:[%s5 + $0x14] sm:$0xf]
    %v203 = vld [vmem:[%s5 + $0x18] sm:$0xf]
    %v204 = vld [vmem:[%s5 + $0x1c] sm:$0xf]
    %v205 = vpack.c.bf16 %v195, %v194
    %v206 = vld [vmem:[%s6] sm:$0xf]
    %v207 = vld [vmem:[%s6 + $0x4] sm:$0xf]
    %v208 = vld [vmem:[%s6 + $0x8] sm:$0xf]
    %v209 = vld [vmem:[%s6 + $0xc] sm:$0xf]
    %v210 = vld [vmem:[%s6 + $0x10] sm:$0xf]
    %v211 = vld [vmem:[%s6 + $0x14] sm:$0xf]
    %v212 = vld [vmem:[%s6 + $0x18] sm:$0xf]
    %v213 = vld [vmem:[%s6 + $0x1c] sm:$0xf]
    %v222 = vunpack.c.l.b16 %v206
    %v223 = vunpack.c.l.b16 %v207
    %v224 = vunpack.c.l.b16 %v208
    %v225 = vunpack.c.l.b16 %v209
    %v226 = vunpack.c.l.b16 %v210
    %v227 = vunpack.c.l.b16 %v211
    %v228 = vunpack.c.l.b16 %v212
    %v229 = vunpack.c.l.b16 %v213
    %v230 = vpack.c.b16 %v223, %v222
    %v231 = vpack.c.b16 %v225, %v224
    %v232 = vpack.c.b16 %v227, %v226
    %v233 = vpack.c.b16 %v229, %v228
    %vm238 = vcmask 523264
    %v240 = vsel %vm238, %v205, 0
    %242 = vmatprep.subr.bf16.mxu0 0
    %243 = vmatpush1.bf16.msra.mxu0 0
    %244 = vmatprep.subr.bf16.mxu0 0
    %245 = vmatpush1.bf16.msra.mxu0 0
    %246 = vmatprep.subr.bf16.mxu0 0
    %247 = vmatpush1.bf16.msra.mxu0 0
    %248 = vmatprep.subr.bf16.mxu0 0
    %249 = vmatpush1.bf16.msra.mxu0 0
    %250 = vmatprep.subr.bf16.mxu0 0
    %251 = vmatpush1.bf16.msra.mxu0 %v233
    %252 = vmatprep.subr.bf16.mxu0 0
    %253 = vmatpush1.bf16.msra.mxu0 %v232
    %254 = vmatprep.subr.bf16.mxu0 0
    %255 = vmatpush1.bf16.msra.mxu0 %v231
    %256 = vmatprep.subr.bf16.mxu0 0
    %257 = vmatpush1.bf16.msra.mxu0 %v230
    %258 = vmatprep.subr.bf16.mxu0 0
    %259 = vmatpush2.bf16.msra.mxu0 0
    %260 = vmatprep.subr.bf16.mxu0 0
    %261 = vmatpush2.bf16.msra.mxu0 0
    %262 = vmatprep.subr.bf16.mxu0 0
    %263 = vmatpush2.bf16.msra.mxu0 0
    %264 = vmatprep.subr.bf16.mxu0 0
    %265 = vmatpush2.bf16.msra.mxu0 0
    %266 = vmatprep.subr.bf16.mxu0 0
    %267 = vmatpush2.bf16.msra.mxu0 0
    %268 = vmatprep.subr.bf16.mxu0 0
    %269 = vmatpush2.bf16.msra.mxu0 0
    %270 = vmatprep.subr.bf16.mxu0 0
    %271 = vmatpush2.bf16.msra.mxu0 0
    %272 = vmatprep.subr.bf16.mxu0 0
    %273 = vmatpush2.bf16.msra.mxu0 0
    %274 = vmatprep.mubr.bf16.mxu0 0
    %275 = vmatmul.mubr.bf16.gmra.mxu0 %v240
    %v276 = vpop.f32.mrf.mxu0
    %v277 = vadd.f32 0.0, %v276
    %v278 = vpop.f32.mrf.mxu0
    %v279 = vpop.f32.mrf.mxu0
    %v280 = vadd.f32 0.0, %v279
    %v281 = vpop.f32.mrf.mxu0
    %282 = vdwg.mxu0
    %v291 = vunpack.c.l.b16 %v197
    %v292 = vunpack.c.l.b16 %v198
    %v293 = vunpack.c.l.b16 %v199
    %v294 = vunpack.c.l.b16 %v200
    %v295 = vunpack.c.l.b16 %v201
    %v296 = vunpack.c.l.b16 %v202
    %v297 = vunpack.c.l.b16 %v203
    %v298 = vunpack.c.l.b16 %v204
    %v299 = vpack.c.b16 %v292, %v291
    %v300 = vpack.c.b16 %v294, %v293
    %v301 = vpack.c.b16 %v296, %v295
    %v302 = vpack.c.b16 %v298, %v297
    %v308 = vsel %vm238, %v196, 0
    %310 = vmatprep.subr.bf16.mxu0 0
    %311 = vmatpush1.bf16.msra.mxu0 0
    %312 = vmatprep.subr.bf16.mxu0 0
    %313 = vmatpush1.bf16.msra.mxu0 0
    %314 = vmatprep.subr.bf16.mxu0 0
    %315 = vmatpush1.bf16.msra.mxu0 0
    %316 = vmatprep.subr.bf16.mxu0 0
    %317 = vmatpush1.bf16.msra.mxu0 0
    %318 = vmatprep.subr.bf16.mxu0 0
    %319 = vmatpush1.bf16.msra.mxu0 %v302
    %320 = vmatprep.subr.bf16.mxu0 0
    %321 = vmatpush1.bf16.msra.mxu0 %v301
    %322 = vmatprep.subr.bf16.mxu0 0
    %323 = vmatpush1.bf16.msra.mxu0 %v300
    %324 = vmatprep.subr.bf16.mxu0 0
    %325 = vmatpush1.bf16.msra.mxu0 %v299
    %326 = vmatprep.subr.bf16.mxu0 0
    %327 = vmatpush2.bf16.msra.mxu0 0
    %328 = vmatprep.subr.bf16.mxu0 0
    %329 = vmatpush2.bf16.msra.mxu0 0
    %330 = vmatprep.subr.bf16.mxu0 0
    %331 = vmatpush2.bf16.msra.mxu0 0
    %332 = vmatprep.subr.bf16.mxu0 0
    %333 = vmatpush2.bf16.msra.mxu0 0
    %334 = vmatprep.subr.bf16.mxu0 0
    %335 = vmatpush2.bf16.msra.mxu0 0
    %336 = vmatprep.subr.bf16.mxu0 0
    %337 = vmatpush2.bf16.msra.mxu0 0
    %338 = vmatprep.subr.bf16.mxu0 0
    %339 = vmatpush2.bf16.msra.mxu0 0
    %340 = vmatprep.subr.bf16.mxu0 0
    %341 = vmatpush2.bf16.msra.mxu0 0
    %342 = vmatprep.mubr.bf16.mxu0 0
    %343 = vmatmul.mubr.bf16.gmra.mxu0 %v308
    %v344 = vpop.f32.mrf.mxu0
    %v345 = vadd.f32 %v277, %v344
    %v346 = vpop.f32.mrf.mxu0
    %v347 = vpop.f32.mrf.mxu0
    %v348 = vadd.f32 %v280, %v347
    %v349 = vpop.f32.mrf.mxu0
    %350 = vdwg.mxu0
    %v351 = vld [vmem:[%s7] sm:$0x1]
    %v353 = vlaneseq
    %v354 = vshrl.u32 %v353, 7
    %v355 = vsub.s32 0, %v354
    %v356 = vrot.slane %v351, %v355
    %v358 = vadd.f32 %v345, %v356
    %v359 = vadd.f32 %v348, %v356
    %vm360 = vcmp.ge.f32.partialorder %v358, 0.0
    %vm361 = vcmp.ge.f32.partialorder %v359, 0.0
    %v362 = vmul.f32 %v358, 0.22916667
    %v363 = vmul.f32 %v359, 0.22916667
    %v364 = vsel %vm360, %v358, %v362
    %v365 = vsel %vm361, %v359, %v363
    %v366 = vpack.c.bf16 %v365, %v364
    %v367 = vld [vmem:[%s8] sm:$0xf]
    %v368 = vld [vmem:[%s8 + $0x4] sm:$0xf]
    %v369 = vld [vmem:[%s8 + $0x8] sm:$0xf]
    %v370 = vld [vmem:[%s8 + $0xc] sm:$0xf]
    %v375 = vunpack.c.l.b16 %v367
    %v376 = vunpack.c.l.b16 %v368
    %v377 = vunpack.c.l.b16 %v369
    %v378 = vunpack.c.l.b16 %v370
    %v379 = vpack.c.b16 %v376, %v375
    %v380 = vpack.c.b16 %v378, %v377
    %v384 = vsel %vm67, %v366, 0
    %386 = vmatprep.subr.bf16.mxu0 0
    %387 = vmatpush1.bf16.msra.mxu0 0
    %388 = vmatprep.subr.bf16.mxu0 0
    %389 = vmatpush1.bf16.msra.mxu0 0
    %390 = vmatprep.subr.bf16.mxu0 0
    %391 = vmatpush1.bf16.msra.mxu0 0
    %392 = vmatprep.subr.bf16.mxu0 0
    %393 = vmatpush1.bf16.msra.mxu0 0
    %394 = vmatprep.subr.bf16.mxu0 0
    %395 = vmatpush1.bf16.msra.mxu0 0
    %396 = vmatprep.subr.bf16.mxu0 0
    %397 = vmatpush1.bf16.msra.mxu0 0
    %398 = vmatprep.subr.bf16.mxu0 0
    %399 = vmatpush1.bf16.msra.mxu0 %v380
    %400 = vmatprep.subr.bf16.mxu0 0
    %401 = vmatpush1.bf16.msra.mxu0 %v379
    %402 = vmatprep.subr.bf16.mxu0 0
    %403 = vmatpush2.bf16.msra.mxu0 0
    %404 = vmatprep.subr.bf16.mxu0 0
    %405 = vmatpush2.bf16.msra.mxu0 0
    %406 = vmatprep.subr.bf16.mxu0 0
    %407 = vmatpush2.bf16.msra.mxu0 0
    %408 = vmatprep.subr.bf16.mxu0 0
    %409 = vmatpush2.bf16.msra.mxu0 0
    %410 = vmatprep.subr.bf16.mxu0 0
    %411 = vmatpush2.bf16.msra.mxu0 0
    %412 = vmatprep.subr.bf16.mxu0 0
    %413 = vmatpush2.bf16.msra.mxu0 0
    %414 = vmatprep.subr.bf16.mxu0 0
    %415 = vmatpush2.bf16.msra.mxu0 0
    %416 = vmatprep.subr.bf16.mxu0 0
    %417 = vmatpush2.bf16.msra.mxu0 0
    %418 = vmatprep.mubr.bf16.mxu0 0
    %419 = vmatmul.mubr.bf16.gmra.mxu0 %v384
    %v420 = vpop.f32.mrf.mxu0
    %v421 = vadd.f32 0.0, %v420
    %v422 = vpop.f32.mrf.mxu0
    %v423 = vpop.f32.mrf.mxu0
    %v424 = vadd.f32 0.0, %v423
    %v425 = vpop.f32.mrf.mxu0
    %426 = vdwg.mxu0
    %427 = vst [vmem:[#allocation2] sm:$0xff] %v421
    %428 = vst [vmem:[#allocation2 + $0x8] sm:$0xff] %v424
    // Predicated region
    $region38: #{tpu_custom_call.1} parent=1 // pred_check
      _
    $region39: #{tpu_custom_call.1} parent=1 // pred_check_branch
      %430 = sbr.rel (0) target = $region41
    $region40: #{tpu_custom_call.1} parent=1 // pred_region
      %s432 = ssub.s32 256, 256
      %433 = vsyncadd [#allocation3], %s432
      %s434 = sshll.u32 [#allocation2], 4
      %s435 = int_to_ptr.vmem [resolvable:$true] %s434
      %440 = dma.vmem_to_hbm [thread:$0]  %s435, 256, %s9, [#allocation3], 128, 128, 8
    $region41: #{tpu_custom_call.1} parent=1 // pred_fallthru
      _
    // Predicated region
    $region42: #{tpu_custom_call.1} parent=1 // pred_check
      _
    $region43: #{tpu_custom_call.1} parent=1 // pred_check_branch
      %442 = sbr.rel (0) target = $region45
    $region44: #{tpu_custom_call.1} parent=1 // pred_region
      %443 = dma.done [#allocation3], 256
    $region45: #{tpu_custom_call.1} parent=1 // pred_fallthru
      _
    %444 = vsyncpa [#allocation3], 1

// kernel: tpu_custom_call.1
$region0: #{tpu_custom_call.1}
  #allocation0 [shape = 'u32[]', space=smem, size = 0x4, offset = 0x4, fixed_abs, tag = 'smem constant byte address 0x4 - core index']
  #allocation1 [shape = 'u32[144,128]{1,0:T(1,128)}', space=vmem, size = 0x12000, scoped, tag = 'internal scratch']
  %s0 = inlined_call_operand.vmem [shape: bf16[2,16,32], index: 0, kind: input, shape index: {}]
  %s1 = inlined_call_operand.vmem [shape: bf16[32,64], index: 1, kind: input, shape index: {}]
  %s2 = inlined_call_operand.vmem [shape: f32[1,64], index: 2, kind: input, shape index: {}]
  %s3 = inlined_call_operand.vmem [shape: bf16[32,64], index: 3, kind: input, shape index: {}]
  %s4 = inlined_call_operand.vmem [shape: f32[1,64], index: 4, kind: input, shape index: {}]
  %s5 = inlined_call_operand.vmem [shape: bf16[64,32], index: 5, kind: input, shape index: {}]
  %s6 = inlined_call_operand.vmem [shape: bf16[64,32], index: 6, kind: input, shape index: {}]
  %s7 = inlined_call_operand.vmem [shape: f32[1,32], index: 7, kind: input, shape index: {}]
  %s8 = inlined_call_operand.vmem [shape: bf16[32,128], index: 8, kind: input, shape index: {}]
  %s9 = inlined_call_operand.hbm [shape: f32[16,128], index: 9, kind: output, shape index: {}]
  %s10 = sld [smem:[#allocation0]]
  $region46: #{tpu_custom_call.1} parent=0
    _
  %s12 = ssub.s32 1, %s10
  %s13 = scalar_select 0, %s12, %s10
  $region1: #{tpu_custom_call.1} parent=0
    #allocation2 [shape = 'u8[8192]{0}', space=vmem, size = 0x2000, scoped, tag = 'output window, operand 0, single buffered']
    #allocation3 [shape = 's32[1]{0}', space=sflag, size = 0x4, scoped, tag = 'scoped memory for tpu_custom_call.1']
    %14 = vsyncpa [#allocation3], 0
    // Predicated region
    $region2: #{tpu_custom_call.1} parent=1 // pred_check
      _
    $region3: #{tpu_custom_call.1} parent=1 // pred_check_branch
      %16 = sbr.rel (0) target = $region5
    $region4: #{tpu_custom_call.1} parent=1 // pred_region
      _
    $region5: #{tpu_custom_call.1} parent=1 // pred_fallthru
      _
    // Predicated region
    $region6: #{tpu_custom_call.1} parent=1 // pred_check
      _
    $region7: #{tpu_custom_call.1} parent=1 // pred_check_branch
      %18 = sbr.rel (0) target = $region9
    $region8: #{tpu_custom_call.1} parent=1 // pred_region
      _
    $region9: #{tpu_custom_call.1} parent=1 // pred_fallthru
      _
    // Predicated region
    $region10: #{tpu_custom_call.1} parent=1 // pred_check
      _
    $region11: #{tpu_custom_call.1} parent=1 // pred_check_branch
      %20 = sbr.rel (0) target = $region13
    $region12: #{tpu_custom_call.1} parent=1 // pred_region
      _
    $region13: #{tpu_custom_call.1} parent=1 // pred_fallthru
      _
    // Predicated region
    $region14: #{tpu_custom_call.1} parent=1 // pred_check
      _
    $region15: #{tpu_custom_call.1} parent=1 // pred_check_branch
      %22 = sbr.rel (0) target = $region17
    $region16: #{tpu_custom_call.1} parent=1 // pred_region
      _
    $region17: #{tpu_custom_call.1} parent=1 // pred_fallthru
      _
    // Predicated region
    $region18: #{tpu_custom_call.1} parent=1 // pred_check
      _
    $region19: #{tpu_custom_call.1} parent=1 // pred_check_branch
      %24 = sbr.rel (0) target = $region21
    $region20: #{tpu_custom_call.1} parent=1 // pred_region
      _
    $region21: #{tpu_custom_call.1} parent=1 // pred_fallthru
      _
    // Predicated region
    $region22: #{tpu_custom_call.1} parent=1 // pred_check
      _
    $region23: #{tpu_custom_call.1} parent=1 // pred_check_branch
      %26 = sbr.rel (0) target = $region25
    $region24: #{tpu_custom_call.1} parent=1 // pred_region
      _
    $region25: #{tpu_custom_call.1} parent=1 // pred_fallthru
      _
    // Predicated region
    $region26: #{tpu_custom_call.1} parent=1 // pred_check
      _
    $region27: #{tpu_custom_call.1} parent=1 // pred_check_branch
      %28 = sbr.rel (0) target = $region29
    $region28: #{tpu_custom_call.1} parent=1 // pred_region
      _
    $region29: #{tpu_custom_call.1} parent=1 // pred_fallthru
      _
    // Predicated region
    $region30: #{tpu_custom_call.1} parent=1 // pred_check
      _
    $region31: #{tpu_custom_call.1} parent=1 // pred_check_branch
      %30 = sbr.rel (0) target = $region33
    $region32: #{tpu_custom_call.1} parent=1 // pred_region
      _
    $region33: #{tpu_custom_call.1} parent=1 // pred_fallthru
      _
    // Predicated region
    $region34: #{tpu_custom_call.1} parent=1 // pred_check
      _
    $region35: #{tpu_custom_call.1} parent=1 // pred_check_branch
      %32 = sbr.rel (0) target = $region37
    $region36: #{tpu_custom_call.1} parent=1 // pred_region
      _
    $region37: #{tpu_custom_call.1} parent=1 // pred_fallthru
      _
    %v34 = vld [vmem:[%s0] sm:$0xf]
    %v35 = vld [vmem:[%s0 + $0x4] sm:$0xf]
    %s36 = scalar_lea.vmem %s0, 8
    %v37 = vld [vmem:[%s36] sm:$0xf]
    %v38 = vld [vmem:[%s36 + $0x4] sm:$0xf]
    %v39 = vld [vmem:[%s1] sm:$0xf]
    %v40 = vld [vmem:[%s1 + $0x4] sm:$0xf]
    %v41 = vld [vmem:[%s1 + $0x8] sm:$0xf]
    %v42 = vld [vmem:[%s1 + $0xc] sm:$0xf]
    %v43 = vld [vmem:[%s2] sm:$0x1]
    %v45 = vlaneseq
    %v46 = vshrl.u32 %v45, 7
    %v47 = vsub.s32 0, %v46
    %v48 = vrot.slane %v43, %v47
    %v52 = vunpack.c.l.b16 %v34
    %v53 = vunpack.c.l.b16 %v35
    %v54 = vpack.c.b16 %v53, %v52
    %v59 = vunpack.c.l.b16 %v39
    %v60 = vunpack.c.l.b16 %v40
    %v61 = vunpack.c.l.b16 %v41
    %v62 = vunpack.c.l.b16 %v42
    %v63 = vpack.c.b16 %v60, %v59
    %v64 = vpack.c.b16 %v62, %v61
    %vm67 = vcmask 261120
    %v69 = vsel %vm67, %v54, 0
    %71 = vmatprep.subr.bf16.mxu0 0
    %72 = vmatpush1.bf16.msra.mxu0 0
    %73 = vmatprep.subr.bf16.mxu0 0
    %74 = vmatpush1.bf16.msra.mxu0 0
    %75 = vmatprep.subr.bf16.mxu0 0
    %76 = vmatpush1.bf16.msra.mxu0 0
    %77 = vmatprep.subr.bf16.mxu0 0
    %78 = vmatpush1.bf16.msra.mxu0 0
    %79 = vmatprep.subr.bf16.mxu0 0
    %80 = vmatpush1.bf16.msra.mxu0 0
    %81 = vmatprep.subr.bf16.mxu0 0
    %82 = vmatpush1.bf16.msra.mxu0 0
    %83 = vmatprep.subr.bf16.mxu0 0
    %84 = vmatpush1.bf16.msra.mxu0 %v64
    %85 = vmatprep.subr.bf16.mxu0 0
    %86 = vmatpush1.bf16.msra.mxu0 %v63
    %87 = vmatprep.subr.bf16.mxu0 0
    %88 = vmatpush2.bf16.msra.mxu0 0
    %89 = vmatprep.subr.bf16.mxu0 0
    %90 = vmatpush2.bf16.msra.mxu0 0
    %91 = vmatprep.subr.bf16.mxu0 0
    %92 = vmatpush2.bf16.msra.mxu0 0
    %93 = vmatprep.subr.bf16.mxu0 0
    %94 = vmatpush2.bf16.msra.mxu0 0
    %95 = vmatprep.subr.bf16.mxu0 0
    %96 = vmatpush2.bf16.msra.mxu0 0
    %97 = vmatprep.subr.bf16.mxu0 0
    %98 = vmatpush2.bf16.msra.mxu0 0
    %99 = vmatprep.subr.bf16.mxu0 0
    %100 = vmatpush2.bf16.msra.mxu0 0
    %101 = vmatprep.subr.bf16.mxu0 0
    %102 = vmatpush2.bf16.msra.mxu0 0
    %103 = vmatprep.mubr.bf16.mxu0 0
    %104 = vmatmul.mubr.bf16.gmra.mxu0 %v69
    %v105 = vpop.f32.mrf.mxu0
    %v106 = vadd.f32 %v48, %v105
    %v107 = vpop.f32.mrf.mxu0
    %v108 = vpop.f32.mrf.mxu0
    %v109 = vadd.f32 %v48, %v108
    %v110 = vpop.f32.mrf.mxu0
    %111 = vdwg.mxu0
    %vm112 = vcmp.ge.f32.partialorder %v106, 0.0
    %vm113 = vcmp.ge.f32.partialorder %v109, 0.0
    %v114 = vmul.f32 %v106, 0.22916667
    %v115 = vmul.f32 %v109, 0.22916667
    %v116 = vsel %vm112, %v106, %v114
    %v117 = vsel %vm113, %v109, %v115
    %v118 = vld [vmem:[%s3] sm:$0xf]
    %v119 = vld [vmem:[%s3 + $0x4] sm:$0xf]
    %v120 = vld [vmem:[%s3 + $0x8] sm:$0xf]
    %v121 = vld [vmem:[%s3 + $0xc] sm:$0xf]
    %v122 = vld [vmem:[%s4] sm:$0x1]
    %v124 = vlaneseq
    %v125 = vshrl.u32 %v124, 7
    %v126 = vsub.s32 0, %v125
    %v127 = vrot.slane %v122, %v126
    %v131 = vunpack.c.l.b16 %v37
    %v132 = vunpack.c.l.b16 %v38
    %v133 = vpack.c.b16 %v132, %v131
    %v138 = vunpack.c.l.b16 %v118
    %v139 = vunpack.c.l.b16 %v119
    %v140 = vunpack.c.l.b16 %v120
    %v141 = vunpack.c.l.b16 %v121
    %v142 = vpack.c.b16 %v139, %v138
    %v143 = vpack.c.b16 %v141, %v140
    %v147 = vsel %vm67, %v133, 0
    %149 = vmatprep.subr.bf16.mxu0 0
    %150 = vmatpush1.bf16.msra.mxu0 0
    %151 = vmatprep.subr.bf16.mxu0 0
    %152 = vmatpush1.bf16.msra.mxu0 0
    %153 = vmatprep.subr.bf16.mxu0 0
    %154 = vmatpush1.bf16.msra.mxu0 0
    %155 = vmatprep.subr.bf16.mxu0 0
    %156 = vmatpush1.bf16.msra.mxu0 0
    %157 = vmatprep.subr.bf16.mxu0 0
    %158 = vmatpush1.bf16.msra.mxu0 0
    %159 = vmatprep.subr.bf16.mxu0 0
    %160 = vmatpush1.bf16.msra.mxu0 0
    %161 = vmatprep.subr.bf16.mxu0 0
    %162 = vmatpush1.bf16.msra.mxu0 %v143
    %163 = vmatprep.subr.bf16.mxu0 0
    %164 = vmatpush1.bf16.msra.mxu0 %v142
    %165 = vmatprep.subr.bf16.mxu0 0
    %166 = vmatpush2.bf16.msra.mxu0 0
    %167 = vmatprep.subr.bf16.mxu0 0
    %168 = vmatpush2.bf16.msra.mxu0 0
    %169 = vmatprep.subr.bf16.mxu0 0
    %170 = vmatpush2.bf16.msra.mxu0 0
    %171 = vmatprep.subr.bf16.mxu0 0
    %172 = vmatpush2.bf16.msra.mxu0 0
    %173 = vmatprep.subr.bf16.mxu0 0
    %174 = vmatpush2.bf16.msra.mxu0 0
    %175 = vmatprep.subr.bf16.mxu0 0
    %176 = vmatpush2.bf16.msra.mxu0 0
    %177 = vmatprep.subr.bf16.mxu0 0
    %178 = vmatpush2.bf16.msra.mxu0 0
    %179 = vmatprep.subr.bf16.mxu0 0
    %180 = vmatpush2.bf16.msra.mxu0 0
    %181 = vmatprep.mubr.bf16.mxu0 0
    %182 = vmatmul.mubr.bf16.gmra.mxu0 %v147
    %v183 = vpop.f32.mrf.mxu0
    %v184 = vadd.f32 %v127, %v183
    %v185 = vpop.f32.mrf.mxu0
    %v186 = vpop.f32.mrf.mxu0
    %v187 = vadd.f32 %v127, %v186
    %v188 = vpop.f32.mrf.mxu0
    %189 = vdwg.mxu0
    %vm190 = vcmp.ge.f32.partialorder %v184, 0.0
    %vm191 = vcmp.ge.f32.partialorder %v187, 0.0
    %v192 = vmul.f32 %v184, 0.22916667
    %v193 = vmul.f32 %v187, 0.22916667
    %v194 = vsel %vm190, %v184, %v192
    %v195 = vsel %vm191, %v187, %v193
    %v196 = vpack.c.bf16 %v117, %v116
    %v197 = vld [vmem:[%s5] sm:$0xf]
    %v198 = vld [vmem:[%s5 + $0x4] sm:$0xf]
    %v199 = vld [vmem:[%s5 + $0x8] sm:$0xf]
    %v200 = vld [vmem:[%s5 + $0xc] sm:$0xf]
    %v201 = vld [vmem:[%s5 + $0x10] sm:$0xf]
    %v202 = vld [vmem:[%s5 + $0x14] sm:$0xf]
    %v203 = vld [vmem:[%s5 + $0x18] sm:$0xf]
    %v204 = vld [vmem:[%s5 + $0x1c] sm:$0xf]
    %v205 = vpack.c.bf16 %v195, %v194
    %v206 = vld [vmem:[%s6] sm:$0xf]
    %v207 = vld [vmem:[%s6 + $0x4] sm:$0xf]
    %v208 = vld [vmem:[%s6 + $0x8] sm:$0xf]
    %v209 = vld [vmem:[%s6 + $0xc] sm:$0xf]
    %v210 = vld [vmem:[%s6 + $0x10] sm:$0xf]
    %v211 = vld [vmem:[%s6 + $0x14] sm:$0xf]
    %v212 = vld [vmem:[%s6 + $0x18] sm:$0xf]
    %v213 = vld [vmem:[%s6 + $0x1c] sm:$0xf]
    %v222 = vunpack.c.l.b16 %v206
    %v223 = vunpack.c.l.b16 %v207
    %v224 = vunpack.c.l.b16 %v208
    %v225 = vunpack.c.l.b16 %v209
    %v226 = vunpack.c.l.b16 %v210
    %v227 = vunpack.c.l.b16 %v211
    %v228 = vunpack.c.l.b16 %v212
    %v229 = vunpack.c.l.b16 %v213
    %v230 = vpack.c.b16 %v223, %v222
    %v231 = vpack.c.b16 %v225, %v224
    %v232 = vpack.c.b16 %v227, %v226
    %v233 = vpack.c.b16 %v229, %v228
    %vm238 = vcmask 523264
    %v240 = vsel %vm238, %v205, 0
    %242 = vmatprep.subr.bf16.mxu0 0
    %243 = vmatpush1.bf16.msra.mxu0 0
    %244 = vmatprep.subr.bf16.mxu0 0
    %245 = vmatpush1.bf16.msra.mxu0 0
    %246 = vmatprep.subr.bf16.mxu0 0
    %247 = vmatpush1.bf16.msra.mxu0 0
    %248 = vmatprep.subr.bf16.mxu0 0
    %249 = vmatpush1.bf16.msra.mxu0 0
    %250 = vmatprep.subr.bf16.mxu0 0
    %251 = vmatpush1.bf16.msra.mxu0 %v233
    %252 = vmatprep.subr.bf16.mxu0 0
    %253 = vmatpush1.bf16.msra.mxu0 %v232
    %254 = vmatprep.subr.bf16.mxu0 0
    %255 = vmatpush1.bf16.msra.mxu0 %v231
    %256 = vmatprep.subr.bf16.mxu0 0
    %257 = vmatpush1.bf16.msra.mxu0 %v230
    %258 = vmatprep.subr.bf16.mxu0 0
    %259 = vmatpush2.bf16.msra.mxu0 0
    %260 = vmatprep.subr.bf16.mxu0 0
    %261 = vmatpush2.bf16.msra.mxu0 0
    %262 = vmatprep.subr.bf16.mxu0 0
    %263 = vmatpush2.bf16.msra.mxu0 0
    %264 = vmatprep.subr.bf16.mxu0 0
    %265 = vmatpush2.bf16.msra.mxu0 0
    %266 = vmatprep.subr.bf16.mxu0 0
    %267 = vmatpush2.bf16.msra.mxu0 0
    %268 = vmatprep.subr.bf16.mxu0 0
    %269 = vmatpush2.bf16.msra.mxu0 0
    %270 = vmatprep.subr.bf16.mxu0 0
    %271 = vmatpush2.bf16.msra.mxu0 0
    %272 = vmatprep.subr.bf16.mxu0 0
    %273 = vmatpush2.bf16.msra.mxu0 0
    %274 = vmatprep.mubr.bf16.mxu0 0
    %275 = vmatmul.mubr.bf16.gmra.mxu0 %v240
    %v276 = vpop.f32.mrf.mxu0
    %v277 = vadd.f32 0.0, %v276
    %v278 = vpop.f32.mrf.mxu0
    %v279 = vpop.f32.mrf.mxu0
    %v280 = vadd.f32 0.0, %v279
    %v281 = vpop.f32.mrf.mxu0
    %282 = vdwg.mxu0
    %v291 = vunpack.c.l.b16 %v197
    %v292 = vunpack.c.l.b16 %v198
    %v293 = vunpack.c.l.b16 %v199
    %v294 = vunpack.c.l.b16 %v200
    %v295 = vunpack.c.l.b16 %v201
    %v296 = vunpack.c.l.b16 %v202
    %v297 = vunpack.c.l.b16 %v203
    %v298 = vunpack.c.l.b16 %v204
    %v299 = vpack.c.b16 %v292, %v291
    %v300 = vpack.c.b16 %v294, %v293
    %v301 = vpack.c.b16 %v296, %v295
    %v302 = vpack.c.b16 %v298, %v297
    %v308 = vsel %vm238, %v196, 0
    %310 = vmatprep.subr.bf16.mxu0 0
    %311 = vmatpush1.bf16.msra.mxu0 0
    %312 = vmatprep.subr.bf16.mxu0 0
    %313 = vmatpush1.bf16.msra.mxu0 0
    %314 = vmatprep.subr.bf16.mxu0 0
    %315 = vmatpush1.bf16.msra.mxu0 0
    %316 = vmatprep.subr.bf16.mxu0 0
    %317 = vmatpush1.bf16.msra.mxu0 0
    %318 = vmatprep.subr.bf16.mxu0 0
    %319 = vmatpush1.bf16.msra.mxu0 %v302
    %320 = vmatprep.subr.bf16.mxu0 0
    %321 = vmatpush1.bf16.msra.mxu0 %v301
    %322 = vmatprep.subr.bf16.mxu0 0
    %323 = vmatpush1.bf16.msra.mxu0 %v300
    %324 = vmatprep.subr.bf16.mxu0 0
    %325 = vmatpush1.bf16.msra.mxu0 %v299
    %326 = vmatprep.subr.bf16.mxu0 0
    %327 = vmatpush2.bf16.msra.mxu0 0
    %328 = vmatprep.subr.bf16.mxu0 0
    %329 = vmatpush2.bf16.msra.mxu0 0
    %330 = vmatprep.subr.bf16.mxu0 0
    %331 = vmatpush2.bf16.msra.mxu0 0
    %332 = vmatprep.subr.bf16.mxu0 0
    %333 = vmatpush2.bf16.msra.mxu0 0
    %334 = vmatprep.subr.bf16.mxu0 0
    %335 = vmatpush2.bf16.msra.mxu0 0
    %336 = vmatprep.subr.bf16.mxu0 0
    %337 = vmatpush2.bf16.msra.mxu0 0
    %338 = vmatprep.subr.bf16.mxu0 0
    %339 = vmatpush2.bf16.msra.mxu0 0
    %340 = vmatprep.subr.bf16.mxu0 0
    %341 = vmatpush2.bf16.msra.mxu0 0
    %342 = vmatprep.mubr.bf16.mxu0 0
    %343 = vmatmul.mubr.bf16.gmra.mxu0 %v308
    %v344 = vpop.f32.mrf.mxu0
    %v345 = vadd.f32 %v277, %v344
    %v346 = vpop.f32.mrf.mxu0
    %v347 = vpop.f32.mrf.mxu0
    %v348 = vadd.f32 %v280, %v347
    %v349 = vpop.f32.mrf.mxu0
    %350 = vdwg.mxu0
    %v351 = vld [vmem:[%s7] sm:$0x1]
    %v353 = vlaneseq
    %v354 = vshrl.u32 %v353, 7
    %v355 = vsub.s32 0, %v354
    %v356 = vrot.slane %v351, %v355
    %v358 = vadd.f32 %v345, %v356
    %v359 = vadd.f32 %v348, %v356
    %vm360 = vcmp.ge.f32.partialorder %v358, 0.0
    %vm361 = vcmp.ge.f32.partialorder %v359, 0.0
    %v362 = vmul.f32 %v358, 0.22916667
    %v363 = vmul.f32 %v359, 0.22916667
    %v364 = vsel %vm360, %v358, %v362
    %v365 = vsel %vm361, %v359, %v363
    %v366 = vpack.c.bf16 %v365, %v364
    %v367 = vld [vmem:[%s8] sm:$0xf]
    %v368 = vld [vmem:[%s8 + $0x4] sm:$0xf]
    %v369 = vld [vmem:[%s8 + $0x8] sm:$0xf]
    %v370 = vld [vmem:[%s8 + $0xc] sm:$0xf]
    %v375 = vunpack.c.l.b16 %v367
    %v376 = vunpack.c.l.b16 %v368
    %v377 = vunpack.c.l.b16 %v369
    %v378 = vunpack.c.l.b16 %v370
    %v379 = vpack.c.b16 %v376, %v375
    %v380 = vpack.c.b16 %v378, %v377
    %v384 = vsel %vm67, %v366, 0
    %386 = vmatprep.subr.bf16.mxu0 0
    %387 = vmatpush1.bf16.msra.mxu0 0
    %388 = vmatprep.subr.bf16.mxu0 0
    %389 = vmatpush1.bf16.msra.mxu0 0
    %390 = vmatprep.subr.bf16.mxu0 0
    %391 = vmatpush1.bf16.msra.mxu0 0
    %392 = vmatprep.subr.bf16.mxu0 0
    %393 = vmatpush1.bf16.msra.mxu0 0
    %394 = vmatprep.subr.bf16.mxu0 0
    %395 = vmatpush1.bf16.msra.mxu0 0
    %396 = vmatprep.subr.bf16.mxu0 0
    %397 = vmatpush1.bf16.msra.mxu0 0
    %398 = vmatprep.subr.bf16.mxu0 0
    %399 = vmatpush1.bf16.msra.mxu0 %v380
    %400 = vmatprep.subr.bf16.mxu0 0
    %401 = vmatpush1.bf16.msra.mxu0 %v379
    %402 = vmatprep.subr.bf16.mxu0 0
    %403 = vmatpush2.bf16.msra.mxu0 0
    %404 = vmatprep.subr.bf16.mxu0 0
    %405 = vmatpush2.bf16.msra.mxu0 0
    %406 = vmatprep.subr.bf16.mxu0 0
    %407 = vmatpush2.bf16.msra.mxu0 0
    %408 = vmatprep.subr.bf16.mxu0 0
    %409 = vmatpush2.bf16.msra.mxu0 0
    %410 = vmatprep.subr.bf16.mxu0 0
    %411 = vmatpush2.bf16.msra.mxu0 0
    %412 = vmatprep.subr.bf16.mxu0 0
    %413 = vmatpush2.bf16.msra.mxu0 0
    %414 = vmatprep.subr.bf16.mxu0 0
    %415 = vmatpush2.bf16.msra.mxu0 0
    %416 = vmatprep.subr.bf16.mxu0 0
    %417 = vmatpush2.bf16.msra.mxu0 0
    %418 = vmatprep.mubr.bf16.mxu0 0
    %419 = vmatmul.mubr.bf16.gmra.mxu0 %v384
    %v420 = vpop.f32.mrf.mxu0
    %v421 = vadd.f32 0.0, %v420
    %v422 = vpop.f32.mrf.mxu0
    %v423 = vpop.f32.mrf.mxu0
    %v424 = vadd.f32 0.0, %v423
    %v425 = vpop.f32.mrf.mxu0
    %426 = vdwg.mxu0
    %427 = vst [vmem:[#allocation2] sm:$0xff] %v421
    %428 = vst [vmem:[#allocation2 + $0x8] sm:$0xff] %v424
    // Predicated region
    $region38: #{tpu_custom_call.1} parent=1 // pred_check
      _
    $region39: #{tpu_custom_call.1} parent=1 // pred_check_branch
      %430 = sbr.rel (0) target = $region41
    $region40: #{tpu_custom_call.1} parent=1 // pred_region
      %s432 = ssub.s32 256, 256
      %433 = vsyncadd [#allocation3], %s432
      %s434 = sshll.u32 [#allocation2], 4
      %s435 = int_to_ptr.vmem [resolvable:$true] %s434
      %440 = dma.vmem_to_hbm [thread:$0]  %s435, 256, %s9, [#allocation3], 128, 128, 8
    $region41: #{tpu_custom_call.1} parent=1 // pred_fallthru
      _
    // Predicated region
    $region42: #{tpu_custom_call.1} parent=1 // pred_check
      _
    $region43: #{tpu_custom_call.1} parent=1 // pred_check_branch
      %442 = sbr.rel (0) target = $region45
    $region44: #{tpu_custom_call.1} parent=1 // pred_region
      %443 = dma.done [#allocation3], 256
    $region45: #{tpu_custom_call.1} parent=1 // pred_fallthru
      _
    %444 = vsyncpa [#allocation3], 1

</llo_original>
